<compile_context>
chip_gen: v6e
topology: v6e:2x2x1
jax: 0.10.0
libtpu: 0.0.40
codegen_flags: <defaults>
</compile_context>

<pallas_src>
import functools

import jax
import jax.numpy as jnp
from jax.experimental import pallas as pl
from jax.experimental.pallas import tpu as pltpu


LANE = 128              # slab width: lane-dense, MXU-friendly
BIAS_ROW = LANE - 1     # bias row / ones-channel lane (127)


def _round_up(x, m):
    return ((x + m - 1) // m) * m


# ---------------------------------------------------------------------------
# Kernel:
#   h   = relu(z @ W0[:input_dim] + b0)        (narrow-K dot, explicit bias;
#                                               the bias row also plants the
#                                               ones-channel in lane 127)
#   h   = relu(h @ Wl)   for trunk layers >= 1 (bias via ones-channel)
#   out = h @ W_heads                          (fused heads, one dense store)
# ---------------------------------------------------------------------------
def decoder_kernel(z_ref, w_ref, out_ref, *, input_dim):
    n_layers = w_ref.shape[0]          # static: n_trunk + 1 fused head layer
    cdt = w_ref.dtype                  # bf16 compute dtype for MXU operands

    # Layer 0: raw z block (no wrapper-side padding), sliced weight + bias.
    w0 = w_ref[0]                                              # (128, 128)
    h = jnp.dot(z_ref[...].astype(cdt), w0[:input_dim, :],
                preferred_element_type=jnp.float32)
    h = h + w0[BIAS_ROW:BIAS_ROW + 1, :].astype(jnp.float32)   # bias + ones-ch
    h = jnp.maximum(h, 0.0)                                    # f32 ReLU (VPU)

    # Remaining trunk layers: full 128x128 dots, bias via the ones-channel.
    for l in range(1, n_layers - 1):
        h = jnp.dot(h.astype(cdt), w_ref[l],
                    preferred_element_type=jnp.float32)
        h = jnp.maximum(h, 0.0)

    # Fused output heads: single lane-dense matmul + single bf16 store.
    out = jnp.dot(h.astype(cdt), w_ref[n_layers - 1],
                  preferred_element_type=jnp.float32)
    out_ref[...] = out.astype(out_ref.dtype)


# ---------------------------------------------------------------------------
# Parameter packing: each layer's (W, b) folded into one zero-padded 128x128
# slab.  Bias lives in row 127; trunk slabs also set [127,127] = 1 so the
# ones-channel (lane 127 of h) is created by layer 0 and propagates through
# Linear + ReLU (relu(1) == 1, padded lanes stay 0).  The head slab packs all
# heads side by side along the output axis.
# ---------------------------------------------------------------------------
def pack_decoder_params(params, input_dim, hidden_dims, head_features,
                        dtype=jnp.bfloat16):
    n_trunk = len(hidden_dims)
    trunk, heads = params[:n_trunk], params[n_trunk:]
    assert input_dim <= LANE - 1
    assert all(h <= LANE - 1 for h in hidden_dims)     # lane 127 reserved
    assert sum(head_features) <= LANE

    slabs = []
    in_dim = input_dim
    for (w, b) in trunk:
        out_dim = w.shape[1]
        slab = jnp.zeros((LANE, LANE), jnp.float32)
        slab = slab.at[:in_dim, :out_dim].set(w)
        slab = slab.at[BIAS_ROW, :out_dim].set(b.reshape(-1))
        slab = slab.at[BIAS_ROW, BIAS_ROW].set(1.0)    # create/propagate ones
        slabs.append(slab)
        in_dim = out_dim

    head_slab = jnp.zeros((LANE, LANE), jnp.float32)
    col = 0
    for (w, b) in heads:
        nf = w.shape[1]
        head_slab = head_slab.at[:in_dim, col:col + nf].set(w)
        head_slab = head_slab.at[BIAS_ROW, col:col + nf].set(b.reshape(-1))
        col += nf
    slabs.append(head_slab)
    return jnp.stack(slabs).astype(dtype)


# ---------------------------------------------------------------------------
# Forward wrapper
# ---------------------------------------------------------------------------
@functools.partial(jax.jit, static_argnames=("input_dim", "head_features",
                                             "block_batch"))
def _decoder_forward(z, w_pack, *, input_dim, head_features, block_batch=1024):
    batch = z.shape[0]
    n_layers = w_pack.shape[0]

    # Batch tile: aim for >= 2 grid steps when batch allows (v7x dual TC via
    # "parallel"), sublane-aligned, capped at block_batch rows (VMEM-safe on
    # all generations).  No explicit padding: Pallas handles the ragged tail.
    bt = min(block_batch, max(8, _round_up(-(-batch // 2), 8)))
    grid = (pl.cdiv(batch, bt),)

    flops = 2 * batch * (input_dim * LANE + (n_layers - 1) * LANE * LANE)
    bytes_accessed = (z.size * z.dtype.itemsize
                      + w_pack.size * w_pack.dtype.itemsize
                      + batch * LANE * 2)               # bf16 output slab

    out = pl.pallas_call(
        functools.partial(decoder_kernel, input_dim=input_dim),
        out_shape=jax.ShapeDtypeStruct((batch, LANE), jnp.bfloat16),
        grid_spec=pltpu.PrefetchScalarGridSpec(
            num_scalar_prefetch=0,
            grid=grid,
            in_specs=[
                # z streamed as-is; last dim equals the full array dim.
                pl.BlockSpec((bt, input_dim), lambda i: (i, 0)),
                # Weights: constant index_map -> fetched once, VMEM-resident.
                pl.BlockSpec((n_layers, LANE, LANE), lambda i: (0, 0, 0)),
            ],
            out_specs=pl.BlockSpec((bt, LANE), lambda i: (i, 0)),
        ),
        compiler_params=pltpu.CompilerParams(
            dimension_semantics=("parallel",)),
        cost_estimate=pl.CostEstimate(flops=flops, transcendentals=0,
                                      bytes_accessed=bytes_accessed),
    )(z, w_pack)

    # Split the fused lane-dense slab back into per-head outputs (upcast f32).
    outs, col = [], 0
    for nf in head_features:
        outs.append(out[:, col:col + nf].astype(jnp.float32))
        col += nf
    return outs


def decoder_forward(z, w_pack, input_dim, head_features, block_batch=1024):
    return _decoder_forward(z, w_pack, input_dim=input_dim,
                            head_features=tuple(head_features),
                            block_batch=block_batch)


# ---------------------------------------------------------------------------
# Parameter init + pure-JAX reference (f32, mirrors nn.Linear semantics)
# ---------------------------------------------------------------------------
def init_decoder_params(key, input_dim, hidden_dims, head_features):
    params = []
    dims = [input_dim] + list(hidden_dims)
    keys = jax.random.split(key, 2 * (len(hidden_dims) + len(head_features)))
    k = 0
    for i in range(len(hidden_dims)):                      # trunk
        fan_in, fan_out = dims[i], dims[i + 1]
        w = jax.random.normal(keys[k], (fan_in, fan_out), jnp.float32) / jnp.sqrt(fan_in)
        b = 0.1 * jax.random.normal(keys[k + 1], (1, fan_out), jnp.float32)
        params.append((w, b)); k += 2
    fan_in = dims[-1]
    for nf in head_features:                               # output heads
        w = jax.random.normal(keys[k], (fan_in, nf), jnp.float32) / jnp.sqrt(fan_in)
        b = 0.1 * jax.random.normal(keys[k + 1], (1, nf), jnp.float32)
        params.append((w, b)); k += 2
    return params


def decoder_reference(z, params, n_trunk):
    h = z
    for (w, b) in params[:n_trunk]:
        h = jnp.maximum(h @ w + b, 0.0)
    return [h @ w + b for (w, b) in params[n_trunk:]]


if __name__ == "__main__":
    # Shapes consistent with the module:
    # Decoder(input_dim=32, hidden_dims=[64, 64], output_modules=[head(16), head(8)])
    batch = 8
    input_dim = 32
    hidden_dims = [64, 64]
    head_features = [16, 8]

    key = jax.random.PRNGKey(0)
    kz, kp = jax.random.split(key)
    z = jax.random.normal(kz, (batch, input_dim), jnp.float32)
    params = init_decoder_params(kp, input_dim, hidden_dims, head_features)

    w_pack = pack_decoder_params(params, input_dim, hidden_dims, head_features)

    outs = decoder_forward(z, w_pack, input_dim, head_features)
    outs = [jax.block_until_ready(o) for o in outs]

    refs = decoder_reference(z, params, len(hidden_dims))
    for o, r in zip(outs, refs):
        assert o.shape == r.shape, (o.shape, r.shape)
        # bf16 matmul operands / bf16 output slab with f32 accumulation:
        # relaxed tolerance.
        assert jnp.max(jnp.abs(o - r)) < 1e-1, float(jnp.max(jnp.abs(o - r)))

    print("KERNEL_OK")
</pallas_src>

<mosaic_0001>
module attributes {stable_mosaic.version = 11 : i64} {
  func.func @decoder_kernel(%arg0: i32, %arg1: memref<8x32xf32, #tpu.memory_space<vmem>>, %arg2: memref<3x128x128xbf16, #tpu.memory_space<vmem>>, %arg3: memref<8x128xbf16, #tpu.memory_space<vmem>>) attributes {dimension_semantics = [#tpu.dimension_semantics<parallel>], iteration_bounds = array<i64: 1>, scalar_prefetch = 0 : i64, scratch_operands = 0 : i64, tpu.core_type = #tpu.core_type<tc>, window_params = [{transform_indices = @transform_0, window_bounds = array<i64: 8, 32>}, {pipeline_mode = #tpu.pipeline_mode<synchronous>, transform_indices = @transform_1, window_bounds = array<i64: 3, 128, 128>}, {transform_indices = @transform_2, window_bounds = array<i64: 8, 128>}]} {
    %c0 = arith.constant 0 : index
    %c0_0 = arith.constant 0 : index
    %c0_1 = arith.constant 0 : index
    %0 = vector.load %arg2[%c0, %c0_0, %c0_1] : memref<3x128x128xbf16, #tpu.memory_space<vmem>>, vector<1x128x128xbf16>
    %1 = vector.shape_cast %0 : vector<1x128x128xbf16> to vector<128x128xbf16>
    %c0_2 = arith.constant 0 : index
    %c0_3 = arith.constant 0 : index
    %2 = vector.load %arg1[%c0_2, %c0_3] : memref<8x32xf32, #tpu.memory_space<vmem>>, vector<8x32xf32>
    %3 = arith.truncf %2 : vector<8x32xf32> to vector<8x32xbf16>
    %4 = vector.extract_strided_slice %1 {offsets = [0, 0], sizes = [32, 128], strides = [1, 1]} : vector<128x128xbf16> to vector<32x128xbf16>
    %cst = arith.constant dense<0.000000e+00> : vector<8x128xf32>
    %5 = tpu.matmul %3, %4, %cst {dimension_numbers = #tpu.dot_dimension_numbers<[1], [0], [0], [1], [0, 0, 1, 1], [], []>} : vector<8x32xbf16>, vector<32x128xbf16>, vector<8x128xf32> -> vector<8x128xf32>
    %6 = vector.extract_strided_slice %1 {offsets = [127, 0], sizes = [1, 128], strides = [1, 1]} : vector<128x128xbf16> to vector<1x128xbf16>
    %7 = arith.extf %6 : vector<1x128xbf16> to vector<1x128xf32>
    %8 = vector.broadcast %7 : vector<1x128xf32> to vector<8x128xf32>
    %9 = arith.addf %5, %8 : vector<8x128xf32>
    %cst_4 = arith.constant 0.000000e+00 : f32
    %10 = vector.broadcast %cst_4 : f32 to vector<8x128xf32>
    %11 = arith.maximumf %9, %10 : vector<8x128xf32>
    %12 = arith.truncf %11 : vector<8x128xf32> to vector<8x128xbf16>
    %c1 = arith.constant 1 : index
    %c0_5 = arith.constant 0 : index
    %c0_6 = arith.constant 0 : index
    %13 = vector.load %arg2[%c1, %c0_5, %c0_6] : memref<3x128x128xbf16, #tpu.memory_space<vmem>>, vector<1x128x128xbf16>
    %14 = vector.shape_cast %13 : vector<1x128x128xbf16> to vector<128x128xbf16>
    %cst_7 = arith.constant dense<0.000000e+00> : vector<8x128xf32>
    %15 = tpu.matmul %12, %14, %cst_7 {dimension_numbers = #tpu.dot_dimension_numbers<[1], [0], [0], [1], [0, 0, 1, 1], [], []>} : vector<8x128xbf16>, vector<128x128xbf16>, vector<8x128xf32> -> vector<8x128xf32>
    %cst_8 = arith.constant 0.000000e+00 : f32
    %16 = vector.broadcast %cst_8 : f32 to vector<8x128xf32>
    %17 = arith.maximumf %15, %16 : vector<8x128xf32>
    %18 = arith.truncf %17 : vector<8x128xf32> to vector<8x128xbf16>
    %c2 = arith.constant 2 : index
    %c0_9 = arith.constant 0 : index
    %c0_10 = arith.constant 0 : index
    %19 = vector.load %arg2[%c2, %c0_9, %c0_10] : memref<3x128x128xbf16, #tpu.memory_space<vmem>>, vector<1x128x128xbf16>
    %20 = vector.shape_cast %19 : vector<1x128x128xbf16> to vector<128x128xbf16>
    %cst_11 = arith.constant dense<0.000000e+00> : vector<8x128xf32>
    %21 = tpu.matmul %18, %20, %cst_11 {dimension_numbers = #tpu.dot_dimension_numbers<[1], [0], [0], [1], [0, 0, 1, 1], [], []>} : vector<8x128xbf16>, vector<128x128xbf16>, vector<8x128xf32> -> vector<8x128xf32>
    %22 = arith.truncf %21 : vector<8x128xf32> to vector<8x128xbf16>
    %c0_12 = arith.constant 0 : index
    %c0_13 = arith.constant 0 : index
    %23 = vector.load %arg3[%c0_12, %c0_13] : memref<8x128xbf16, #tpu.memory_space<vmem>>, vector<8x128xbf16>
    tpu.vector_store %arg3[%c0_12, %c0_13], %22 {strides = array<i32>} : memref<8x128xbf16, #tpu.memory_space<vmem>>, vector<8x128xbf16>,
    return
  }
  func.func @transform_0(%arg0: i32) -> (i32, i32) {
    %c0_i32 = arith.constant 0 : i32
    %c0_i32_0 = arith.constant 0 : i32
    return %arg0, %c0_i32 : i32, i32
  }
  func.func @transform_1(%arg0: i32) -> (i32, i32, i32) {
    %c0_i32 = arith.constant 0 : i32
    %c0_i32_0 = arith.constant 0 : i32
    %c0_i32_1 = arith.constant 0 : i32
    %c0_i32_2 = arith.constant 0 : i32
    return %c0_i32, %c0_i32_0, %c0_i32_1 : i32, i32, i32
  }
  func.func @transform_2(%arg0: i32) -> (i32, i32) {
    %c0_i32 = arith.constant 0 : i32
    %c0_i32_0 = arith.constant 0 : i32
    return %arg0, %c0_i32 : i32, i32
  }
}

</mosaic_0001>

<llo_original>
// kernel: _decoder_forward.1
$region0: #{_decoder_forward.1}
  #allocation0 [shape = 'u32[]', space=smem, size = 0x4, offset = 0x4, fixed_abs, tag = 'smem constant byte address 0x4 - core index']
  #allocation1 [shape = 'u32[144,128]{1,0:T(1,128)}', space=vmem, size = 0x12000, scoped, tag = 'internal scratch']
  %s0 = inlined_call_operand.hbm [shape: f32[8,32], index: 0, kind: input, shape index: {}]
  %s1 = inlined_call_operand.hbm [shape: bf16[3,128,128], index: 1, kind: input, shape index: {}]
  %s2 = inlined_call_operand.vmem [shape: bf16[8,128], index: 2, kind: output, shape index: {}]
  %s3 = sld [smem:[#allocation0]]
  $region26: #{_decoder_forward.1} parent=0
    _
  %s5 = ssub.s32 1, %s3
  %s6 = scalar_select 0, %s5, %s3
  $region1: #{_decoder_forward.1} parent=0
    #allocation2 [shape = 'u8[4096]{0}', space=vmem, size = 0x1000, scoped, tag = 'input window, operand 0, single buffered']
    #allocation3 [shape = 's32[1]{0}', space=sflag, size = 0x4, scoped, tag = 'scoped memory for _decoder_forward.1']
    #allocation4 [shape = 'u8[98304]{0}', space=vmem, size = 0x18000, scoped, tag = 'input window, operand 1, single buffered']
    #allocation5 [shape = 's32[1]{0}', space=sflag, size = 0x4, scoped, tag = 'scoped memory for _decoder_forward.1']
    %7 = vsyncpa [#allocation3], 0
    %8 = vsyncpa [#allocation5], 0
    // Predicated region
    $region2: #{_decoder_forward.1} parent=1 // pred_check
      _
    $region3: #{_decoder_forward.1} parent=1 // pred_check_branch
      %10 = sbr.rel (0) target = $region5
    $region4: #{_decoder_forward.1} parent=1 // pred_region
      %s12 = ssub.s32 128, 128
      %13 = vsyncadd [#allocation3], %s12
      %s15 = sshll.u32 [#allocation2], 4
      %s16 = int_to_ptr.vmem [resolvable:$true] %s15
      %18 = dma.hbm_to_vmem [thread:$0]  %s0, 128, %s16, [#allocation3]
    $region5: #{_decoder_forward.1} parent=1 // pred_fallthru
      _
    // Predicated region
    $region6: #{_decoder_forward.1} parent=1 // pred_check
      _
    $region7: #{_decoder_forward.1} parent=1 // pred_check_branch
      %20 = sbr.rel (0) target = $region9
    $region8: #{_decoder_forward.1} parent=1 // pred_region
      %s22 = ssub.s32 3072, 3072
      %23 = vsyncadd [#allocation5], %s22
      %s24 = sshll.u32 [#allocation4], 4
      %s25 = int_to_ptr.vmem [resolvable:$true] %s24
      %30 = dma.hbm_to_vmem [thread:$0]  %s1, 3072, %s25, [#allocation5], 64, 64, 4
    $region9: #{_decoder_forward.1} parent=1 // pred_fallthru
      _
    // Predicated region
    $region10: #{_decoder_forward.1} parent=1 // pred_check
      _
    $region11: #{_decoder_forward.1} parent=1 // pred_check_branch
      %32 = sbr.rel (0) target = $region13
    $region12: #{_decoder_forward.1} parent=1 // pred_region
      %33 = dma.done [#allocation3], 128
    $region13: #{_decoder_forward.1} parent=1 // pred_fallthru
      _
    // Predicated region
    $region14: #{_decoder_forward.1} parent=1 // pred_check
      _
    $region15: #{_decoder_forward.1} parent=1 // pred_check_branch
      %35 = sbr.rel (0) target = $region17
    $region16: #{_decoder_forward.1} parent=1 // pred_region
      %36 = dma.done [#allocation5], 3072
    $region17: #{_decoder_forward.1} parent=1 // pred_fallthru
      _
    %v38 = vld [vmem:[#allocation4] sm:$0xf]
    %v39 = vld [vmem:[#allocation4 + $0x4] sm:$0xf]
    %v40 = vld [vmem:[#allocation4 + $0x8] sm:$0xf]
    %v41 = vld [vmem:[#allocation4 + $0xc] sm:$0xf]
    %v42 = vld [vmem:[#allocation4 + $0x3c] sm:$0xf]
    %v43 = vld [vmem:[#allocation2] sm:$0xff]
    %v44 = vpack.c.bf16 %v43, %v43
    %v45 = vunpack.c.l.bf16 %v42
    %v46 = vlaneseq
    %v47 = vshrl.u32 %v46, 7
    %v48 = vsub.s32 7, %v47
    %v49 = vrot.slane %v45, %v48
    %v54 = vunpack.c.l.b16 %v38
    %v55 = vunpack.c.l.b16 %v39
    %v56 = vunpack.c.l.b16 %v40
    %v57 = vunpack.c.l.b16 %v41
    %v58 = vpack.c.b16 %v55, %v54
    %v59 = vpack.c.b16 %v57, %v56
    %vm62 = vcmask 261120
    %v64 = vsel %vm62, %v44, 0
    %66 = vmatprep.subr.bf16.mxu0 0
    %67 = vmatpush1.bf16.msra.mxu0 0
    %68 = vmatprep.subr.bf16.mxu0 0
    %69 = vmatpush1.bf16.msra.mxu0 0
    %70 = vmatprep.subr.bf16.mxu0 0
    %71 = vmatpush1.bf16.msra.mxu0 0
    %72 = vmatprep.subr.bf16.mxu0 0
    %73 = vmatpush1.bf16.msra.mxu0 0
    %74 = vmatprep.subr.bf16.mxu0 0
    %75 = vmatpush1.bf16.msra.mxu0 0
    %76 = vmatprep.subr.bf16.mxu0 0
    %77 = vmatpush1.bf16.msra.mxu0 0
    %78 = vmatprep.subr.bf16.mxu0 0
    %79 = vmatpush1.bf16.msra.mxu0 %v59
    %80 = vmatprep.subr.bf16.mxu0 0
    %81 = vmatpush1.bf16.msra.mxu0 %v58
    %82 = vmatprep.subr.bf16.mxu0 0
    %83 = vmatpush2.bf16.msra.mxu0 0
    %84 = vmatprep.subr.bf16.mxu0 0
    %85 = vmatpush2.bf16.msra.mxu0 0
    %86 = vmatprep.subr.bf16.mxu0 0
    %87 = vmatpush2.bf16.msra.mxu0 0
    %88 = vmatprep.subr.bf16.mxu0 0
    %89 = vmatpush2.bf16.msra.mxu0 0
    %90 = vmatprep.subr.bf16.mxu0 0
    %91 = vmatpush2.bf16.msra.mxu0 0
    %92 = vmatprep.subr.bf16.mxu0 0
    %93 = vmatpush2.bf16.msra.mxu0 0
    %94 = vmatprep.subr.bf16.mxu0 0
    %95 = vmatpush2.bf16.msra.mxu0 0
    %96 = vmatprep.subr.bf16.mxu0 0
    %97 = vmatpush2.bf16.msra.mxu0 0
    %98 = vmatprep.mubr.bf16.mxu0 0
    %99 = vmatmul.mubr.bf16.gmra.mxu0 %v64
    %v100 = vpop.f32.mrf.mxu0
    %v101 = vadd.f32 %v49, %v100
    %v102 = vpop.f32.mrf.mxu0
    %v103 = vpop.f32.mrf.mxu0
    %v104 = vpop.f32.mrf.mxu0
    %105 = vdwg.mxu0
    %v106 = vmax.f32 %v101, 0.0
    %v107 = vpack.c.bf16 %v106, %v106
    %s108 = scalar_lea.vmem [#allocation4], 64
    %v109 = vld [vmem:[%s108] sm:$0xf]
    %v110 = vld [vmem:[%s108 + $0x4] sm:$0xf]
    %v111 = vld [vmem:[%s108 + $0x8] sm:$0xf]
    %v112 = vld [vmem:[%s108 + $0xc] sm:$0xf]
    %v113 = vld [vmem:[%s108 + $0x10] sm:$0xf]
    %v114 = vld [vmem:[%s108 + $0x14] sm:$0xf]
    %v115 = vld [vmem:[%s108 + $0x18] sm:$0xf]
    %v116 = vld [vmem:[%s108 + $0x1c] sm:$0xf]
    %v117 = vld [vmem:[%s108 + $0x20] sm:$0xf]
    %v118 = vld [vmem:[%s108 + $0x24] sm:$0xf]
    %v119 = vld [vmem:[%s108 + $0x28] sm:$0xf]
    %v120 = vld [vmem:[%s108 + $0x2c] sm:$0xf]
    %v121 = vld [vmem:[%s108 + $0x30] sm:$0xf]
    %v122 = vld [vmem:[%s108 + $0x34] sm:$0xf]
    %v123 = vld [vmem:[%s108 + $0x38] sm:$0xf]
    %v124 = vld [vmem:[%s108 + $0x3c] sm:$0xf]
    %v141 = vunpack.c.l.b16 %v109
    %v142 = vunpack.c.l.b16 %v110
    %v143 = vunpack.c.l.b16 %v111
    %v144 = vunpack.c.l.b16 %v112
    %v145 = vunpack.c.l.b16 %v113
    %v146 = vunpack.c.l.b16 %v114
    %v147 = vunpack.c.l.b16 %v115
    %v148 = vunpack.c.l.b16 %v116
    %v149 = vunpack.c.l.b16 %v117
    %v150 = vunpack.c.l.b16 %v118
    %v151 = vunpack.c.l.b16 %v119
    %v152 = vunpack.c.l.b16 %v120
    %v153 = vunpack.c.l.b16 %v121
    %v154 = vunpack.c.l.b16 %v122
    %v155 = vunpack.c.l.b16 %v123
    %v156 = vunpack.c.l.b16 %v124
    %v157 = vpack.c.b16 %v142, %v141
    %v158 = vpack.c.b16 %v144, %v143
    %v159 = vpack.c.b16 %v146, %v145
    %v160 = vpack.c.b16 %v148, %v147
    %v161 = vpack.c.b16 %v150, %v149
    %v162 = vpack.c.b16 %v152, %v151
    %v163 = vpack.c.b16 %v154, %v153
    %v164 = vpack.c.b16 %v156, %v155
    %173 = vmatprep.subr.bf16.mxu0 0
    %174 = vmatpush1.bf16.msra.mxu0 %v164
    %175 = vmatprep.subr.bf16.mxu0 0
    %176 = vmatpush1.bf16.msra.mxu0 %v163
    %177 = vmatprep.subr.bf16.mxu0 0
    %178 = vmatpush1.bf16.msra.mxu0 %v162
    %179 = vmatprep.subr.bf16.mxu0 0
    %180 = vmatpush1.bf16.msra.mxu0 %v161
    %181 = vmatprep.subr.bf16.mxu0 0
    %182 = vmatpush1.bf16.msra.mxu0 %v160
    %183 = vmatprep.subr.bf16.mxu0 0
    %184 = vmatpush1.bf16.msra.mxu0 %v159
    %185 = vmatprep.subr.bf16.mxu0 0
    %186 = vmatpush1.bf16.msra.mxu0 %v158
    %187 = vmatprep.subr.bf16.mxu0 0
    %188 = vmatpush1.bf16.msra.mxu0 %v157
    %189 = vmatprep.subr.bf16.mxu0 0
    %190 = vmatpush2.bf16.msra.mxu0 0
    %191 = vmatprep.subr.bf16.mxu0 0
    %192 = vmatpush2.bf16.msra.mxu0 0
    %193 = vmatprep.subr.bf16.mxu0 0
    %194 = vmatpush2.bf16.msra.mxu0 0
    %195 = vmatprep.subr.bf16.mxu0 0
    %196 = vmatpush2.bf16.msra.mxu0 0
    %197 = vmatprep.subr.bf16.mxu0 0
    %198 = vmatpush2.bf16.msra.mxu0 0
    %199 = vmatprep.subr.bf16.mxu0 0
    %200 = vmatpush2.bf16.msra.mxu0 0
    %201 = vmatprep.subr.bf16.mxu0 0
    %202 = vmatpush2.bf16.msra.mxu0 0
    %203 = vmatprep.subr.bf16.mxu0 0
    %204 = vmatpush2.bf16.msra.mxu0 0
    %205 = vmatprep.mubr.bf16.mxu0 0
    %206 = vmatmul.mubr.bf16.gmra.mxu0 %v107
    %v207 = vpop.f32.mrf.mxu0
    %v208 = vadd.f32 0.0, %v207
    %v209 = vpop.f32.mrf.mxu0
    %v210 = vpop.f32.mrf.mxu0
    %v211 = vpop.f32.mrf.mxu0
    %212 = vdwg.mxu0
    %v213 = vmax.f32 %v208, 0.0
    %v214 = vpack.c.bf16 %v213, %v213
    %s215 = scalar_lea.vmem [#allocation4], 128
    %v216 = vld [vmem:[%s215] sm:$0xf]
    %v217 = vld [vmem:[%s215 + $0x4] sm:$0xf]
    %v218 = vld [vmem:[%s215 + $0x8] sm:$0xf]
    %v219 = vld [vmem:[%s215 + $0xc] sm:$0xf]
    %v220 = vld [vmem:[%s215 + $0x10] sm:$0xf]
    %v221 = vld [vmem:[%s215 + $0x14] sm:$0xf]
    %v222 = vld [vmem:[%s215 + $0x18] sm:$0xf]
    %v223 = vld [vmem:[%s215 + $0x1c] sm:$0xf]
    %v224 = vld [vmem:[%s215 + $0x20] sm:$0xf]
    %v225 = vld [vmem:[%s215 + $0x24] sm:$0xf]
    %v226 = vld [vmem:[%s215 + $0x28] sm:$0xf]
    %v227 = vld [vmem:[%s215 + $0x2c] sm:$0xf]
    %v228 = vld [vmem:[%s215 + $0x30] sm:$0xf]
    %v229 = vld [vmem:[%s215 + $0x34] sm:$0xf]
    %v230 = vld [vmem:[%s215 + $0x38] sm:$0xf]
    %v231 = vld [vmem:[%s215 + $0x3c] sm:$0xf]
    %v248 = vunpack.c.l.b16 %v216
    %v249 = vunpack.c.l.b16 %v217
    %v250 = vunpack.c.l.b16 %v218
    %v251 = vunpack.c.l.b16 %v219
    %v252 = vunpack.c.l.b16 %v220
    %v253 = vunpack.c.l.b16 %v221
    %v254 = vunpack.c.l.b16 %v222
    %v255 = vunpack.c.l.b16 %v223
    %v256 = vunpack.c.l.b16 %v224
    %v257 = vunpack.c.l.b16 %v225
    %v258 = vunpack.c.l.b16 %v226
    %v259 = vunpack.c.l.b16 %v227
    %v260 = vunpack.c.l.b16 %v228
    %v261 = vunpack.c.l.b16 %v229
    %v262 = vunpack.c.l.b16 %v230
    %v263 = vunpack.c.l.b16 %v231
    %v264 = vpack.c.b16 %v249, %v248
    %v265 = vpack.c.b16 %v251, %v250
    %v266 = vpack.c.b16 %v253, %v252
    %v267 = vpack.c.b16 %v255, %v254
    %v268 = vpack.c.b16 %v257, %v256
    %v269 = vpack.c.b16 %v259, %v258
    %v270 = vpack.c.b16 %v261, %v260
    %v271 = vpack.c.b16 %v263, %v262
    %280 = vmatprep.subr.bf16.mxu0 0
    %281 = vmatpush1.bf16.msra.mxu0 %v271
    %282 = vmatprep.subr.bf16.mxu0 0
    %283 = vmatpush1.bf16.msra.mxu0 %v270
    %284 = vmatprep.subr.bf16.mxu0 0
    %285 = vmatpush1.bf16.msra.mxu0 %v269
    %286 = vmatprep.subr.bf16.mxu0 0
    %287 = vmatpush1.bf16.msra.mxu0 %v268
    %288 = vmatprep.subr.bf16.mxu0 0
    %289 = vmatpush1.bf16.msra.mxu0 %v267
    %290 = vmatprep.subr.bf16.mxu0 0
    %291 = vmatpush1.bf16.msra.mxu0 %v266
    %292 = vmatprep.subr.bf16.mxu0 0
    %293 = vmatpush1.bf16.msra.mxu0 %v265
    %294 = vmatprep.subr.bf16.mxu0 0
    %295 = vmatpush1.bf16.msra.mxu0 %v264
    %296 = vmatprep.subr.bf16.mxu0 0
    %297 = vmatpush2.bf16.msra.mxu0 0
    %298 = vmatprep.subr.bf16.mxu0 0
    %299 = vmatpush2.bf16.msra.mxu0 0
    %300 = vmatprep.subr.bf16.mxu0 0
    %301 = vmatpush2.bf16.msra.mxu0 0
    %302 = vmatprep.subr.bf16.mxu0 0
    %303 = vmatpush2.bf16.msra.mxu0 0
    %304 = vmatprep.subr.bf16.mxu0 0
    %305 = vmatpush2.bf16.msra.mxu0 0
    %306 = vmatprep.subr.bf16.mxu0 0
    %307 = vmatpush2.bf16.msra.mxu0 0
    %308 = vmatprep.subr.bf16.mxu0 0
    %309 = vmatpush2.bf16.msra.mxu0 0
    %310 = vmatprep.subr.bf16.mxu0 0
    %311 = vmatpush2.bf16.msra.mxu0 0
    %312 = vmatprep.mubr.bf16.mxu0 0
    %313 = vmatmul.mubr.bf16.gmra.mxu0 %v214
    %v314 = vpop.f32.mrf.mxu0
    %v315 = vadd.f32 0.0, %v314
    %v316 = vpop.f32.mrf.mxu0
    %v317 = vpop.f32.mrf.mxu0
    %v318 = vpop.f32.mrf.mxu0
    %319 = vdwg.mxu0
    %v320 = vpack.c.bf16 %v315, %v315
    %321 = vst [vmem:[%s2] sm:$0xf] %v320
    // Predicated region
    $region18: #{_decoder_forward.1} parent=1 // pred_check
      _
    $region19: #{_decoder_forward.1} parent=1 // pred_check_branch
      %323 = sbr.rel (0) target = $region21
    $region20: #{_decoder_forward.1} parent=1 // pred_region
      _
    $region21: #{_decoder_forward.1} parent=1 // pred_fallthru
      _
    // Predicated region
    $region22: #{_decoder_forward.1} parent=1 // pred_check
      _
    $region23: #{_decoder_forward.1} parent=1 // pred_check_branch
      %325 = sbr.rel (0) target = $region25
    $region24: #{_decoder_forward.1} parent=1 // pred_region
      _
    $region25: #{_decoder_forward.1} parent=1 // pred_fallthru
      _
    %326 = vsyncpa [#allocation3], 1
    %327 = vsyncpa [#allocation5], 1

</llo_original>
